<compile_context>
chip_gen: v7x
topology: tpu7x:2x2x1
jax: 0.10.0
libtpu: 0.0.40
codegen_flags: <defaults>
</compile_context>

<pallas_src>
import functools

import jax
import jax.numpy as jnp
from jax.experimental import pallas as pl
from jax.experimental.pallas import tpu as pltpu

_EPS = 1e-12  # torch.nn.functional.normalize eps


def _place_cells_kernel(states_ref, cells_t_ref, out_ref, *, inv_two_fs2: float):
    # states_ref : (TM, D) tile of flattened states
    # cells_t_ref: (D, C) pre-normalized, pre-transposed place cells (invariant)
    # out_ref    : (TM, C) softmax activations for this tile of rows
    s = states_ref[...].astype(jnp.float32)

    # F.normalize(p=2, dim=1): v / max(||v||_2, eps) == v * rsqrt(max(||v||^2, eps^2))
    sumsq = jnp.sum(s * s, axis=1, keepdims=True)
    s_n = s * jax.lax.rsqrt(jnp.maximum(sumsq, jnp.float32(_EPS * _EPS)))

    # cosine similarity on the MXU: (TM, D) @ (D, C) -> (TM, C)
    cos = jnp.dot(s_n, cells_t_ref[...], preferred_element_type=jnp.float32)

    logits = -((1.0 - cos) ** 2) * inv_two_fs2

    # softmax over dim=1 (the numCells axis); exact reciprocal keeps f32 parity
    m = jnp.max(logits, axis=1, keepdims=True)
    e = jnp.exp(logits - m)
    denom = jnp.sum(e, axis=1, keepdims=True)
    out_ref[...] = (e * pl.reciprocal(denom, approx=False)).astype(out_ref.dtype)


def _round_up(x: int, m: int) -> int:
    return ((x + m - 1) // m) * m


def _vmem_capacity_bytes() -> int:
    try:
        return int(pltpu.get_tpu_info().vmem_capacity_bytes)
    except Exception:
        return 128 << 20  # v5e/v6e physical VMEM; safe fallback everywhere


def _choose_tile_m(n: int, d: int, c: int, requested: int,
                   vmem_budget_bytes: int) -> int:
    """Largest row tile (multiple of 8, <= requested) whose working set fits
    the generation-aware VMEM budget, with at least ~4 grid steps for large N
    so the parallel grid axis feeds both v7x TensorCores."""
    if n <= 0:
        return 8
    n8 = _round_up(n, 8)
    tile = min(_round_up(requested, 8), n8)

    # Prefer >= 4 grid steps for medium/large N (v7x has 2 TCs sharing HBM);
    # keep a 512-row floor so per-step overhead stays amortized.
    if n8 > 4 * 512:
        tile = min(tile, max(512, _round_up(pl.cdiv(n8, 4), 8)))

    # Honest VMEM estimate: blocks are lane-padded to 128 lanes, the state and
    # output tiles are double-buffered, and the kernel body materializes ~4
    # full-width (tile, C) f32 intermediates (s_n/cos/logits/e) in scratch.
    d_pad = _round_up(d, 128)
    c_pad = _round_up(c, 128)

    def bytes_needed(t: int) -> int:
        io = 2 * t * (d_pad + c_pad) * 4        # double-buffered state + out tiles
        cells = 2 * d_pad * c_pad * 4           # place-cell block (buffered)
        scratch = 4 * t * c_pad * 4             # in-kernel f32 intermediates
        return io + cells + scratch

    while tile > 8 and bytes_needed(tile) > vmem_budget_bytes:
        tile = max(8, _round_up(tile // 2, 8))
    return tile


def place_cells_forward(x, place_cells, field_size, cell_dim, *,
                        tile_m=4096, out_dtype=jnp.float32):
    """Pallas equivalent of PlaceCells.forward.

    x           : any shape whose elements reshape to (-1, cell_dim)
    place_cells : (numCells, cell_dim)
    returns     : (N, numCells) softmax activations in out_dtype
                  (use out_dtype=jnp.bfloat16 to halve the dominant HBM write
                   stream if downstream tolerates ~3-digit probabilities)
    """
    states = jnp.reshape(x, (-1, cell_dim))
    n, d = states.shape
    c = place_cells.shape[0]

    if n == 0:
        return jnp.zeros((0, c), out_dtype)

    # Loop-invariant work hoisted out of the kernel: normalize the place cells
    # once and pre-transpose to (D, C) so the MXU RHS needs no per-step XLU work.
    pc = place_cells.astype(jnp.float32)
    pc_n = pc / jnp.maximum(
        jnp.sqrt(jnp.sum(pc * pc, axis=1, keepdims=True)), _EPS)
    cells_t = pc_n.T  # (D, C)

    # Generation-aware budget for the kernel working set (~1/3 of physical
    # VMEM, capped at 24 MiB) plus an explicit scoped-VMEM limit so v5e's
    # 16 MiB default never binds and v7x's halved VMEM is respected.
    phys_vmem = _vmem_capacity_bytes()
    vmem_budget = min(phys_vmem // 3, 24 << 20)
    vmem_limit = int(min(phys_vmem // 2, 48 << 20))

    tile_m = _choose_tile_m(n, d, c, tile_m, vmem_budget_bytes=vmem_budget)

    # No jnp.pad / out[:n] round trips: ragged N is handled by Pallas's
    # partial final block (reads past N see garbage rows, but every row's
    # result depends only on that row, and out-of-bounds writes are masked).
    grid_m = pl.cdiv(n, tile_m)

    kernel = functools.partial(
        _place_cells_kernel,
        inv_two_fs2=1.0 / (2.0 * float(field_size) ** 2))

    out = pl.pallas_call(
        kernel,
        out_shape=jax.ShapeDtypeStruct((n, c), out_dtype),
        grid_spec=pl.GridSpec(
            grid=(grid_m,),
            in_specs=[
                pl.BlockSpec((tile_m, d), lambda i: (i, 0)),  # tile of state rows
                pl.BlockSpec((d, c), lambda i: (0, 0)),       # full (D, C) cells
            ],
            out_specs=pl.BlockSpec((tile_m, c), lambda i: (i, 0)),
        ),
        compiler_params=pltpu.CompilerParams(
            # Row tiles are independent -> shards the grid across both v7x
            # TensorCores; no-op on single-TC v5e/v6e.
            dimension_semantics=("parallel",),
            vmem_limit_bytes=vmem_limit,
        ),
    )(states, cells_t)

    return out


def _reference_forward(x, place_cells, field_size, cell_dim):
    states = jnp.reshape(x, (-1, cell_dim)).astype(jnp.float32)
    s_n = states / jnp.maximum(
        jnp.linalg.norm(states, axis=1, keepdims=True), _EPS)
    c_n = place_cells / jnp.maximum(
        jnp.linalg.norm(place_cells, axis=1, keepdims=True), _EPS)
    cos = s_n @ c_n.T
    logits = -((1.0 - cos) ** 2) / (2.0 * field_size ** 2)
    return jax.nn.softmax(logits, axis=1)


if __name__ == "__main__":
    # Module hyperparameters (synthetic, deterministic).
    num_cells = 128
    cell_dim = 32
    field_size = 0.5

    key = jax.random.PRNGKey(0)
    k_cells, k_x1, k_x2 = jax.random.split(key, 3)

    # placeCells buffer: (numCells, cellDim)
    cell_positions = jax.random.normal(
        k_cells, (num_cells, cell_dim), dtype=jnp.float32)

    # Case 1: batch=2, seq=8, hidden=cellDim=32 -> flattens to (16, 32) rows.
    x1 = jax.random.normal(k_x1, (2, 8, cell_dim), dtype=jnp.float32)
    out1 = jax.block_until_ready(
        place_cells_forward(x1, cell_positions, field_size, cell_dim))
    ref1 = _reference_forward(x1, cell_positions, field_size, cell_dim)
    assert out1.shape == (16, num_cells)
    assert jnp.allclose(out1, ref1, atol=1e-5, rtol=1e-5), "mismatch (even rows)"

    # Case 2: ragged row count (3*37 = 111 rows) exercises the partial final
    # block path (no jnp.pad / output slice involved).
    x2 = jax.random.normal(k_x2, (3, 37, cell_dim), dtype=jnp.float32)
    out2 = jax.block_until_ready(
        place_cells_forward(x2, cell_positions, field_size, cell_dim))
    ref2 = _reference_forward(x2, cell_positions, field_size, cell_dim)
    assert out2.shape == (111, num_cells)
    assert jnp.allclose(out2, ref2, atol=1e-5, rtol=1e-5), "mismatch (ragged rows)"

    # Case 3: bf16 output (f32 math inside, only the final store narrows).
    out3 = jax.block_until_ready(
        place_cells_forward(x1, cell_positions, field_size, cell_dim,
                            out_dtype=jnp.bfloat16))
    assert out3.dtype == jnp.bfloat16
    assert jnp.allclose(out3.astype(jnp.float32), ref1, atol=5e-3), "mismatch (bf16)"

    print("KERNEL_OK")
</pallas_src>

<mosaic_0001>
module attributes {stable_mosaic.version = 11 : i64} {
  func.func @_place_cells_kernel(%arg0: i32, %arg1: memref<16x32xf32, #tpu.memory_space<vmem>>, %arg2: memref<32x128xf32, #tpu.memory_space<vmem>>, %arg3: memref<16x128xf32, #tpu.memory_space<vmem>>) attributes {dimension_semantics = [#tpu.dimension_semantics<parallel>], iteration_bounds = array<i64: 1>, scalar_prefetch = 0 : i64, scratch_operands = 0 : i64, tpu.core_type = #tpu.core_type<tc>, window_params = [{transform_indices = @transform_0, window_bounds = array<i64: 16, 32>}, {pipeline_mode = #tpu.pipeline_mode<synchronous>, transform_indices = @transform_1, window_bounds = array<i64: 32, 128>}, {transform_indices = @transform_2, window_bounds = array<i64: 16, 128>}]} {
    %c0 = arith.constant 0 : index
    %c0_0 = arith.constant 0 : index
    %0 = vector.load %arg1[%c0, %c0_0] : memref<16x32xf32, #tpu.memory_space<vmem>>, vector<16x32xf32>
    %1 = arith.mulf %0, %0 : vector<16x32xf32>
    %cst = arith.constant dense<0.000000e+00> : vector<16xf32>
    %2 = vector.multi_reduction <add>, %1, %cst [1] : vector<16x32xf32> to vector<16xf32>
    %3 = vector.shape_cast %2 : vector<16xf32> to vector<16x1xf32>
    %cst_1 = arith.constant 1.000000e-24 : f32
    %4 = vector.broadcast %cst_1 : f32 to vector<16x1xf32>
    %5 = arith.maximumf %3, %4 : vector<16x1xf32>
    %6 = math.rsqrt %5 : vector<16x1xf32>
    %7 = vector.broadcast %6 : vector<16x1xf32> to vector<16x32xf32>
    %8 = arith.mulf %0, %7 : vector<16x32xf32>
    %c0_2 = arith.constant 0 : index
    %c0_3 = arith.constant 0 : index
    %9 = vector.load %arg2[%c0_2, %c0_3] : memref<32x128xf32, #tpu.memory_space<vmem>>, vector<32x128xf32>
    %cst_4 = arith.constant dense<0.000000e+00> : vector<16x128xf32>
    %10 = tpu.matmul %8, %9, %cst_4 {dimension_numbers = #tpu.dot_dimension_numbers<[1], [0], [0], [1], [0, 0, 1, 1], [], []>} : vector<16x32xf32>, vector<32x128xf32>, vector<16x128xf32> -> vector<16x128xf32>
    %cst_5 = arith.constant 1.000000e+00 : f32
    %11 = vector.broadcast %cst_5 : f32 to vector<16x128xf32>
    %12 = arith.subf %11, %10 : vector<16x128xf32>
    %13 = arith.mulf %12, %12 : vector<16x128xf32>
    %cst_6 = arith.constant 0.000000e+00 : f32
    %14 = vector.broadcast %cst_6 : f32 to vector<16x128xf32>
    %15 = arith.subf %14, %13 : vector<16x128xf32>
    %cst_7 = arith.constant 2.000000e+00 : f32
    %16 = vector.broadcast %cst_7 : f32 to vector<16x128xf32>
    %17 = arith.mulf %15, %16 : vector<16x128xf32>
    %cst_8 = arith.constant dense<0xFF800000> : vector<16xf32>
    %18 = vector.multi_reduction <maximumf>, %17, %cst_8 [1] : vector<16x128xf32> to vector<16xf32>
    %19 = vector.shape_cast %18 : vector<16xf32> to vector<16x1xf32>
    %20 = vector.broadcast %19 : vector<16x1xf32> to vector<16x128xf32>
    %21 = arith.subf %17, %20 : vector<16x128xf32>
    %22 = math.exp %21 : vector<16x128xf32>
    %cst_9 = arith.constant dense<0.000000e+00> : vector<16xf32>
    %23 = vector.multi_reduction <add>, %22, %cst_9 [1] : vector<16x128xf32> to vector<16xf32>
    %24 = vector.shape_cast %23 : vector<16xf32> to vector<16x1xf32>
    %25 = tpu.reciprocal %24 : vector<16x1xf32> -> vector<16x1xf32>
    %26 = vector.broadcast %25 : vector<16x1xf32> to vector<16x128xf32>
    %27 = arith.mulf %22, %26 : vector<16x128xf32>
    %c0_10 = arith.constant 0 : index
    %c0_11 = arith.constant 0 : index
    %28 = vector.load %arg3[%c0_10, %c0_11] : memref<16x128xf32, #tpu.memory_space<vmem>>, vector<16x128xf32>
    tpu.vector_store %arg3[%c0_10, %c0_11], %27 {strides = array<i32>} : memref<16x128xf32, #tpu.memory_space<vmem>>, vector<16x128xf32>,
    return
  }
  func.func @transform_0(%arg0: i32) -> (i32, i32) {
    %c0_i32 = arith.constant 0 : i32
    %c0_i32_0 = arith.constant 0 : i32
    return %arg0, %c0_i32 : i32, i32
  }
  func.func @transform_1(%arg0: i32) -> (i32, i32) {
    %c0_i32 = arith.constant 0 : i32
    %c0_i32_0 = arith.constant 0 : i32
    %c0_i32_1 = arith.constant 0 : i32
    return %c0_i32, %c0_i32_0 : i32, i32
  }
  func.func @transform_2(%arg0: i32) -> (i32, i32) {
    %c0_i32 = arith.constant 0 : i32
    %c0_i32_0 = arith.constant 0 : i32
    return %arg0, %c0_i32 : i32, i32
  }
}

</mosaic_0001>

<llo_original>
// kernel: tpu_custom_call.1
$region0: #{tpu_custom_call.1}
  #allocation0 [shape = 'u32[]', space=smem, size = 0x4, offset = 0x4, fixed_abs, tag = 'smem constant byte address 0x4 - core index']
  #allocation1 [shape = 'u32[144,128]{1,0:T(1,128)}', space=vmem, size = 0x12000, scoped, tag = 'internal scratch']
  %s0 = inlined_call_operand.hbm [shape: f32[16,32], index: 0, kind: input, shape index: {}]
  %s1 = inlined_call_operand.hbm [shape: f32[32,128], index: 1, kind: input, shape index: {}]
  %s2 = inlined_call_operand.hbm [shape: f32[16,128], index: 2, kind: output, shape index: {}]
  %s3 = sld [smem:[#allocation0]]
  $region26: #{tpu_custom_call.1} parent=0
    _
  %s5 = ssub.s32 1, %s3
  %s6 = scalar_select 0, %s5, %s3
  $region1: #{tpu_custom_call.1} parent=0
    #allocation2 [shape = 'u8[8192]{0}', space=vmem, size = 0x2000, scoped, tag = 'input window, operand 0, single buffered']
    #allocation3 [shape = 's32[1]{0}', space=sflag, size = 0x4, scoped, tag = 'scoped memory for tpu_custom_call.1']
    #allocation4 [shape = 's32[1]{0}', space=sflag, size = 0x4, scoped, tag = 'scoped memory for tpu_custom_call.1']
    #allocation5 [shape = 'u8[16384]{0}', space=vmem, size = 0x4000, scoped, tag = 'input window, operand 1, single buffered']
    #allocation6 [shape = 's32[1]{0}', space=sflag, size = 0x4, scoped, tag = 'scoped memory for tpu_custom_call.1']
    #allocation7 [shape = 'u8[8192]{0}', space=vmem, size = 0x2000, scoped, tag = 'output window, operand 0, single buffered']
    %7 = vsyncpa [#allocation3], 0
    %8 = vsyncpa [#allocation6], 0
    %9 = vsyncpa [#allocation4], 0
    // Predicated region
    $region2: #{tpu_custom_call.1} parent=1 // pred_check
      _
    $region3: #{tpu_custom_call.1} parent=1 // pred_check_branch
      %11 = sbr.rel (0) target = $region5
    $region4: #{tpu_custom_call.1} parent=1 // pred_region
      %s13 = ssub.s32 256, 256
      %14 = vsyncadd [#allocation3], %s13
      %s15 = sshll.u32 [#allocation2], 4
      %s16 = int_to_ptr.vmem [resolvable:$true] %s15
      %21 = dma.hbm_to_vmem [thread:$0]  %s0, 256, %s16, [#allocation3], 128, 128, 8
    $region5: #{tpu_custom_call.1} parent=1 // pred_fallthru
      _
    // Predicated region
    $region6: #{tpu_custom_call.1} parent=1 // pred_check
      _
    $region7: #{tpu_custom_call.1} parent=1 // pred_check_branch
      %23 = sbr.rel (0) target = $region9
    $region8: #{tpu_custom_call.1} parent=1 // pred_region
      %s25 = ssub.s32 512, 512
      %26 = vsyncadd [#allocation6], %s25
      %s27 = sshll.u32 [#allocation5], 4
      %s28 = int_to_ptr.vmem [resolvable:$true] %s27
      %33 = dma.hbm_to_vmem [thread:$0]  %s1, 512, %s28, [#allocation6], 128, 128, 8
    $region9: #{tpu_custom_call.1} parent=1 // pred_fallthru
      _
    // Predicated region
    $region10: #{tpu_custom_call.1} parent=1 // pred_check
      _
    $region11: #{tpu_custom_call.1} parent=1 // pred_check_branch
      %35 = sbr.rel (0) target = $region13
    $region12: #{tpu_custom_call.1} parent=1 // pred_region
      %36 = dma.done [#allocation3], 256
    $region13: #{tpu_custom_call.1} parent=1 // pred_fallthru
      _
    // Predicated region
    $region14: #{tpu_custom_call.1} parent=1 // pred_check
      _
    $region15: #{tpu_custom_call.1} parent=1 // pred_check_branch
      %38 = sbr.rel (0) target = $region17
    $region16: #{tpu_custom_call.1} parent=1 // pred_region
      %39 = dma.done [#allocation6], 512
    $region17: #{tpu_custom_call.1} parent=1 // pred_fallthru
      _
    %v40 = vld [vmem:[#allocation2] sm:$0xff]
    %v41 = vld [vmem:[#allocation2 + $0x8] sm:$0xff]
    %v42 = vmul.f32 %v40, %v40
    %v43 = vmul.f32 %v41, %v41
    %vm44 = vcmask 261120
    %v45 = vsel %vm44, %v42, 0.0
    %46 = vadd.xlane.f32.xlu0 %v45
    %v47 = vpop.xlane.xlu0 %46
    %v48 = vsel %vm44, %v43, 0.0
    %49 = vadd.xlane.f32.xlu0 %v48
    %v50 = vpop.xlane.xlu0 %49
    %v51 = vmax.f32 %v47, 1e-24
    %v52 = vmax.f32 %v50, 1e-24
    %v53 = vrsqrt.pop %v51
    %v54 = vrsqrt.pop %v52
    %v55 = vmul.f32 %v40, %v53
    %v56 = vmul.f32 %v41, %v54
    %v57 = vld [vmem:[#allocation5] sm:$0xff]
    %v58 = vld [vmem:[#allocation5 + $0x8] sm:$0xff]
    %v59 = vld [vmem:[#allocation5 + $0x10] sm:$0xff]
    %v60 = vld [vmem:[#allocation5 + $0x18] sm:$0xff]
    %v62 = vsel %vm44, %v55, 0
    %v65 = vsel %vm44, %v56, 0
    %67 = vmatprep.subr.mxu0 0.0
    %68 = vmatpush1.msra.mxu0 %v57
    %69 = vmatprep.subr.mxu0 0.0
    %70 = vmatpush1.msra.mxu0 %v58
    %71 = vmatprep.subr.mxu0 0.0
    %72 = vmatpush1.msra.mxu0 %v59
    %73 = vmatprep.subr.mxu0 0.0
    %74 = vmatpush1.msra.mxu0 %v60
    %75 = vmatprep.subr.mxu0 0.0
    %76 = vmatpush1.msra.mxu0 0.0
    %77 = vmatprep.subr.mxu0 0.0
    %78 = vmatpush1.msra.mxu0 0.0
    %79 = vmatprep.subr.mxu0 0.0
    %80 = vmatpush1.msra.mxu0 0.0
    %81 = vmatprep.subr.mxu0 0.0
    %82 = vmatpush1.msra.mxu0 0.0
    %83 = vmatprep.subr.mxu0 0.0
    %84 = vmatpush1.msra.mxu0 0.0
    %85 = vmatprep.subr.mxu0 0.0
    %86 = vmatpush1.msra.mxu0 0.0
    %87 = vmatprep.subr.mxu0 0.0
    %88 = vmatpush1.msra.mxu0 0.0
    %89 = vmatprep.subr.mxu0 0.0
    %90 = vmatpush1.msra.mxu0 0.0
    %91 = vmatprep.subr.mxu0 0.0
    %92 = vmatpush1.msra.mxu0 0.0
    %93 = vmatprep.subr.mxu0 0.0
    %94 = vmatpush1.msra.mxu0 0.0
    %95 = vmatprep.subr.mxu0 0.0
    %96 = vmatpush1.msra.mxu0 0.0
    %97 = vmatprep.subr.mxu0 0.0
    %98 = vmatpush1.msra.mxu0 0.0
    %99 = vmatprep.subr.mxu0 0.0
    %100 = vmatpush1.msra.mxu0 0.0
    %101 = vmatprep.subr.mxu0 0.0
    %102 = vmatpush1.msra.mxu0 0.0
    %103 = vmatprep.subr.mxu0 0.0
    %104 = vmatpush1.msra.mxu0 0.0
    %105 = vmatprep.subr.mxu0 0.0
    %106 = vmatpush1.msra.mxu0 0.0
    %107 = vmatprep.subr.mxu0 0.0
    %108 = vmatpush1.msra.mxu0 0.0
    %109 = vmatprep.subr.mxu0 0.0
    %110 = vmatpush1.msra.mxu0 0.0
    %111 = vmatprep.subr.mxu0 0.0
    %112 = vmatpush1.msra.mxu0 0.0
    %113 = vmatprep.subr.mxu0 0.0
    %114 = vmatpush1.msra.mxu0 0.0
    %115 = vmatprep.subr.mxu0 0.0
    %116 = vmatpush1.msra.mxu0 0.0
    %117 = vmatprep.subr.mxu0 0.0
    %118 = vmatpush1.msra.mxu0 0.0
    %119 = vmatprep.subr.mxu0 0.0
    %120 = vmatpush1.msra.mxu0 0.0
    %121 = vmatprep.subr.mxu0 0.0
    %122 = vmatpush1.msra.mxu0 0.0
    %123 = vmatprep.subr.mxu0 0.0
    %124 = vmatpush1.msra.mxu0 0.0
    %125 = vmatprep.subr.mxu0 0.0
    %126 = vmatpush1.msra.mxu0 0.0
    %127 = vmatprep.subr.mxu0 0.0
    %128 = vmatpush1.msra.mxu0 0.0
    %129 = vmatprep.subr.mxu0 0.0
    %130 = vmatpush1.msra.mxu0 0.0
    %131 = vmatprep.mubr.f32.mxu0 0.0
    %132 = vmatmul.mubr.f32.gmra.mrb[0].mxu0 %v62
    %v133 = vpop.f32.mrb[0].mxu0
    %v134 = vadd.f32 0.0, %v133
    %v135 = vpop.f32.mrb[0].mxu0
    %136 = vmatprep.mubr.f32.mxu0 0.0
    %137 = vmatmul.mubr.f32.gmra.mrb[0].mxu0 %v65
    %v138 = vpop.f32.mrb[0].mxu0
    %v139 = vadd.f32 0.0, %v138
    %v140 = vpop.f32.mrb[0].mxu0
    %141 = vdwg.mxu0
    %v142 = vsub.f32 1.0, %v134
    %v143 = vsub.f32 1.0, %v139
    %v144 = vmul.f32 %v142, %v142
    %v145 = vmul.f32 %v143, %v143
    %v146 = vsub.f32 0.0, %v144
    %v147 = vsub.f32 0.0, %v145
    %v148 = vmul.f32 %v146, 2.0
    %v149 = vmul.f32 %v147, 2.0
    %150 = vmax.xlane.f32.xlu0 %v148
    %v151 = vpop.xlane.xlu0 %150
    %152 = vmax.xlane.f32.xlu0 %v149
    %v153 = vpop.xlane.xlu0 %152
    %v154 = vsub.f32 %v148, %v151
    %v155 = vsub.f32 %v149, %v153
    %v156 = vmul.f32 %v154, 1.442695
    %v157 = vpow.pop %v156
    %v158 = vmul.f32 %v155, 1.442695
    %v159 = vpow.pop %v158
    %160 = vadd.xlane.f32.xlu0 %v157
    %v161 = vpop.xlane.xlu0 %160
    %162 = vadd.xlane.f32.xlu0 %v159
    %v163 = vpop.xlane.xlu0 %162
    %v164 = vrcp.pop %v161
    %v165 = vrcp.pop %v163
    %v166 = vmul.f32 %v157, %v164
    %v167 = vmul.f32 %v159, %v165
    %168 = vst [vmem:[#allocation7] sm:$0xff] %v166
    %169 = vst [vmem:[#allocation7 + $0x8] sm:$0xff] %v167
    // Predicated region
    $region18: #{tpu_custom_call.1} parent=1 // pred_check
      _
    $region19: #{tpu_custom_call.1} parent=1 // pred_check_branch
      %171 = sbr.rel (0) target = $region21
    $region20: #{tpu_custom_call.1} parent=1 // pred_region
      %s173 = ssub.s32 256, 256
      %174 = vsyncadd [#allocation4], %s173
      %s175 = sshll.u32 [#allocation7], 4
      %s176 = int_to_ptr.vmem [resolvable:$true] %s175
      %181 = dma.vmem_to_hbm [thread:$0]  %s176, 256, %s2, [#allocation4], 128, 128, 8
    $region21: #{tpu_custom_call.1} parent=1 // pred_fallthru
      _
    // Predicated region
    $region22: #{tpu_custom_call.1} parent=1 // pred_check
      _
    $region23: #{tpu_custom_call.1} parent=1 // pred_check_branch
      %183 = sbr.rel (0) target = $region25
    $region24: #{tpu_custom_call.1} parent=1 // pred_region
      %184 = dma.done [#allocation4], 256
    $region25: #{tpu_custom_call.1} parent=1 // pred_fallthru
      _
    %185 = vsyncpa [#allocation3], 1
    %186 = vsyncpa [#allocation6], 1
    %187 = vsyncpa [#allocation4], 1

</llo_original>
